<compile_context>
chip_gen: v7x
topology: tpu7x:2x2x1
jax: 0.10.0
libtpu: 0.0.40
codegen_flags: <defaults>
</compile_context>

<pallas_src>
import numpy as np
import jax
import jax.numpy as jnp
from jax.experimental import pallas as pl
from jax.experimental.pallas import tpu as pltpu

EPS = 1e-5  # PyTorch BatchNorm2d default eps


# ----------------------------------------------------------------------------
# Pallas kernel
# ----------------------------------------------------------------------------
def _make_basic_block_kernel(n, oh, ow, cin, cout, has_shortcut):
    P = n * oh * ow
    inv_p = 1.0 / P

    def bn(h, gamma, beta, relu):
        # one-pass train-mode BatchNorm folded into per-channel scale/bias
        s = jnp.sum(h, axis=1, keepdims=True)           # (cout, 1)
        ss = jnp.sum(h * h, axis=1, keepdims=True)
        mean = s * inv_p
        var = jnp.maximum(ss * inv_p - mean * mean, 0.0)  # clamp for safety
        scale = gamma * jax.lax.rsqrt(var + EPS)
        bias = beta - mean * scale
        y = h * scale + bias
        return jnp.maximum(y, 0.0) if relu else y

    def kernel(*refs):
        if has_shortcut:
            (p1_ref, xs_ref, m_ref, w1_ref, g1_ref, b1_ref,
             w2_ref, g2_ref, b2_ref, ws_ref, gs_ref, bs_ref, out_ref) = refs
        else:
            (p1_ref, xs_ref, m_ref, w1_ref, g1_ref, b1_ref,
             w2_ref, g2_ref, b2_ref, out_ref) = refs

        # ---- conv1: single bf16 matmul, f32 accumulation; BN1 + ReLU ----
        h1 = jnp.dot(w1_ref[...], p1_ref[...],
                     preferred_element_type=jnp.float32)     # (cout, P) f32
        h1 = bn(h1, g1_ref[...], b1_ref[...], relu=True)

        # ---- conv2: 9 shifted operands via lane rolls + boundary masks ----
        # shifted_tap[:, p] = h1[:, p + off_tap]  (off = dh*ow + dw), masked at
        # image borders.  Masks are precomputed in the glue (static per shape).
        m_all = m_ref[...]                                    # (9, P) f32
        parts = []
        t = 0
        for kh in range(3):
            for kw in range(3):
                off = (kh - 1) * ow + (kw - 1)
                if off == 0:
                    parts.append(h1)                          # center tap: no mask
                else:
                    shifted = pltpu.roll(h1, shift=(-off) % P, axis=1)
                    parts.append(shifted * m_all[t:t + 1, :])
                t += 1
        # sublane-tile-aligned concat (blocks of `cout` rows) -> one big-K matmul
        patches = jnp.concatenate(parts, axis=0).astype(jnp.bfloat16)  # (9*cout, P)
        res = jnp.dot(w2_ref[...], patches,
                      preferred_element_type=jnp.float32)     # (cout, P) f32
        res = bn(res, g2_ref[...], b2_ref[...], relu=False)

        # ---- shortcut ----
        if has_shortcut:
            sc = jnp.dot(ws_ref[...], xs_ref[...],
                         preferred_element_type=jnp.float32)  # 1x1 conv (bf16 ops)
            sc = bn(sc, gs_ref[...], bs_ref[...], relu=False)
        else:
            sc = xs_ref[...]                                  # identity, f32

        # ---- residual add + final ReLU; lane-dense (cout, P) store ----
        out_ref[...] = jnp.maximum(res + sc, 0.0)

    return kernel


# ----------------------------------------------------------------------------
# Glue: parameters, layout, im2col for the (possibly strided) first conv
# ----------------------------------------------------------------------------
def init_basic_block_params(key, in_channels, out_channels, stride):
    has_shortcut = (stride != 1) or (in_channels != out_channels)
    ks = jax.random.split(key, 9)
    params = dict(
        w1=0.1 * jax.random.normal(ks[0], (out_channels, in_channels, 3, 3), jnp.float32),
        g1=1.0 + 0.1 * jax.random.normal(ks[1], (out_channels,), jnp.float32),
        b1=0.1 * jax.random.normal(ks[2], (out_channels,), jnp.float32),
        w2=0.1 * jax.random.normal(ks[3], (out_channels, out_channels, 3, 3), jnp.float32),
        g2=1.0 + 0.1 * jax.random.normal(ks[4], (out_channels,), jnp.float32),
        b2=0.1 * jax.random.normal(ks[5], (out_channels,), jnp.float32),
    )
    if has_shortcut:
        params.update(
            ws=0.1 * jax.random.normal(ks[6], (out_channels, in_channels, 1, 1), jnp.float32),
            gs=1.0 + 0.1 * jax.random.normal(ks[7], (out_channels,), jnp.float32),
            bs=0.1 * jax.random.normal(ks[8], (out_channels,), jnp.float32),
        )
    return params, has_shortcut


def _boundary_masks(n, oh, ow):
    """Static (9, P) validity masks for the 9 conv2 taps in flat-pixel order."""
    P = n * oh * ow
    idx = np.arange(P)
    col = idx % ow
    row = (idx // ow) % oh
    masks = np.empty((9, P), np.float32)
    t = 0
    for kh in range(3):
        dh = kh - 1
        for kw in range(3):
            dw = kw - 1
            valid = ((row + dh >= 0) & (row + dh < oh) &
                     (col + dw >= 0) & (col + dw < ow))
            masks[t] = valid.astype(np.float32)
            t += 1
    return jnp.asarray(masks)


def basic_block_forward(x_nchw, params, stride):
    x = jnp.transpose(x_nchw, (0, 2, 3, 1)).astype(jnp.float32)      # NCHW -> NHWC
    n, h, w, cin = x.shape
    cout = params['w1'].shape[0]
    has_shortcut = 'ws' in params

    oh = (h - 1) // stride + 1   # kernel=3, padding=1
    ow = (w - 1) // stride + 1
    P = n * oh * ow

    # im2col for conv1 (stride folded in), channel-major (9*cin, P), bf16 operand
    xp = jnp.pad(x, ((0, 0), (1, 1), (1, 1), (0, 0)))
    cols = []
    for kh in range(3):
        for kw in range(3):
            patch = xp[:, kh:kh + (oh - 1) * stride + 1:stride,
                       kw:kw + (ow - 1) * stride + 1:stride, :]
            cols.append(patch.reshape(P, cin))
    p1t = jnp.concatenate(cols, axis=1).T.astype(jnp.bfloat16)       # (9*cin, P)

    # PyTorch conv weights (O, I, kH, kW) -> (O, kH*kW*I), bf16 MXU operands
    w1t = jnp.transpose(params['w1'], (0, 2, 3, 1)).reshape(cout, 9 * cin).astype(jnp.bfloat16)
    w2t = jnp.transpose(params['w2'], (0, 2, 3, 1)).reshape(cout, 9 * cout).astype(jnp.bfloat16)

    def colv(p):                      # (C,) -> (C, 1) for lane broadcast in-kernel
        return p.reshape(-1, 1)

    if has_shortcut:
        xst = x[:, ::stride, ::stride, :].reshape(P, cin).T.astype(jnp.bfloat16)  # (cin, P)
        wst = params['ws'].reshape(cout, cin).astype(jnp.bfloat16)
    else:
        xst = x.reshape(P, cin).T                                    # (cout, P) f32 identity

    masks = _boundary_masks(n, oh, ow)                               # (9, P) f32

    inputs = [p1t, xst, masks, w1t, colv(params['g1']), colv(params['b1']),
              w2t, colv(params['g2']), colv(params['b2'])]
    if has_shortcut:
        inputs += [wst, colv(params['gs']), colv(params['bs'])]

    kernel = _make_basic_block_kernel(n, oh, ow, cin, cout, has_shortcut)
    out_cp = pl.pallas_call(
        kernel,
        out_shape=jax.ShapeDtypeStruct((cout, P), jnp.float32),      # lane-dense output
        in_specs=[pl.BlockSpec(memory_space=pltpu.MemorySpace.VMEM)] * len(inputs),
        out_specs=pl.BlockSpec(memory_space=pltpu.MemorySpace.VMEM),
    )(*inputs)

    # (cout, P) -> (cout, n, oh, ow) -> NCHW
    return jnp.transpose(out_cp.reshape(cout, n, oh, ow), (1, 0, 2, 3))


# ----------------------------------------------------------------------------
# Matching-precision JAX reference (bf16 conv operands / f32 accumulation,
# train-mode batch-stat BatchNorm) — used only for the correctness check.
# ----------------------------------------------------------------------------
def basic_block_reference(x_nchw, params, stride):
    x = jnp.transpose(x_nchw, (0, 2, 3, 1)).astype(jnp.float32)

    def conv(inp, w_oihw, s, pad):
        w = jnp.transpose(w_oihw, (2, 3, 1, 0)).astype(jnp.bfloat16)  # HWIO
        return jax.lax.conv_general_dilated(
            inp.astype(jnp.bfloat16), w, (s, s), pad,
            dimension_numbers=('NHWC', 'HWIO', 'NHWC'),
            preferred_element_type=jnp.float32)

    def bn(h, g, b):
        mean = h.mean(axis=(0, 1, 2), keepdims=True)
        var = ((h - mean) ** 2).mean(axis=(0, 1, 2), keepdims=True)
        return g * (h - mean) * jax.lax.rsqrt(var + EPS) + b

    h = conv(x, params['w1'], stride, ((1, 1), (1, 1)))
    h = jnp.maximum(bn(h, params['g1'], params['b1']), 0.0)
    h = conv(h, params['w2'], 1, ((1, 1), (1, 1)))
    h = bn(h, params['g2'], params['b2'])
    if 'ws' in params:
        s_ = bn(conv(x, params['ws'], stride, ((0, 0), (0, 0))),
                params['gs'], params['bs'])
    else:
        s_ = x
    out = jnp.maximum(h + s_, 0.0)
    return jnp.transpose(out, (0, 3, 1, 2))


if __name__ == "__main__":
    key = jax.random.PRNGKey(0)
    kx1, kx2, kp1, kp2 = jax.random.split(key, 4)

    # Case 1: downsampling block (stride=2, 4 -> 8 channels) -> 1x1-conv shortcut
    x1 = jax.random.normal(kx1, (2, 4, 16, 16), jnp.float32)          # NCHW
    params1, _ = init_basic_block_params(kp1, 4, 8, stride=2)
    out1 = basic_block_forward(x1, params1, stride=2)
    jax.block_until_ready(out1)
    ref1 = basic_block_reference(x1, params1, stride=2)
    assert out1.shape == (2, 8, 8, 8), out1.shape
    err1 = float(jnp.max(jnp.abs(out1 - ref1)))
    assert err1 < 1e-2, err1

    # Case 2: identity shortcut (stride=1, in == out channels)
    x2 = jax.random.normal(kx2, (2, 8, 16, 16), jnp.float32)          # NCHW
    params2, _ = init_basic_block_params(kp2, 8, 8, stride=1)
    out2 = basic_block_forward(x2, params2, stride=1)
    jax.block_until_ready(out2)
    ref2 = basic_block_reference(x2, params2, stride=1)
    assert out2.shape == (2, 8, 16, 16), out2.shape
    err2 = float(jnp.max(jnp.abs(out2 - ref2)))
    assert err2 < 1e-2, err2

    print("KERNEL_OK")
</pallas_src>

<mosaic_0001>
module attributes {stable_mosaic.version = 11 : i64} {
  func.func @kernel(%arg0: memref<36x128xbf16, #tpu.memory_space<vmem>>, %arg1: memref<4x128xbf16, #tpu.memory_space<vmem>>, %arg2: memref<9x128xf32, #tpu.memory_space<vmem>>, %arg3: memref<8x36xbf16, #tpu.memory_space<vmem>>, %arg4: memref<8x1xf32, #tpu.memory_space<vmem>>, %arg5: memref<8x1xf32, #tpu.memory_space<vmem>>, %arg6: memref<8x72xbf16, #tpu.memory_space<vmem>>, %arg7: memref<8x1xf32, #tpu.memory_space<vmem>>, %arg8: memref<8x1xf32, #tpu.memory_space<vmem>>, %arg9: memref<8x4xbf16, #tpu.memory_space<vmem>>, %arg10: memref<8x1xf32, #tpu.memory_space<vmem>>, %arg11: memref<8x1xf32, #tpu.memory_space<vmem>>, %arg12: memref<8x128xf32, #tpu.memory_space<vmem>>) attributes {dimension_semantics = [], scalar_prefetch = 0 : i64, scratch_operands = 0 : i64, tpu.core_type = #tpu.core_type<tc>} {
    %c0 = arith.constant 0 : index
    %c0_0 = arith.constant 0 : index
    %0 = vector.load %arg3[%c0, %c0_0] : memref<8x36xbf16, #tpu.memory_space<vmem>>, vector<8x36xbf16>
    %c0_1 = arith.constant 0 : index
    %c0_2 = arith.constant 0 : index
    %1 = vector.load %arg0[%c0_1, %c0_2] : memref<36x128xbf16, #tpu.memory_space<vmem>>, vector<36x128xbf16>
    %cst = arith.constant dense<0.000000e+00> : vector<8x128xf32>
    %2 = tpu.matmul %0, %1, %cst {dimension_numbers = #tpu.dot_dimension_numbers<[1], [0], [0], [1], [0, 0, 1, 1], [], []>} : vector<8x36xbf16>, vector<36x128xbf16>, vector<8x128xf32> -> vector<8x128xf32>
    %c0_3 = arith.constant 0 : index
    %c0_4 = arith.constant 0 : index
    %3 = vector.load %arg4[%c0_3, %c0_4] : memref<8x1xf32, #tpu.memory_space<vmem>>, vector<8x1xf32>
    %c0_5 = arith.constant 0 : index
    %c0_6 = arith.constant 0 : index
    %4 = vector.load %arg5[%c0_5, %c0_6] : memref<8x1xf32, #tpu.memory_space<vmem>>, vector<8x1xf32>
    %cst_7 = arith.constant dense<0.000000e+00> : vector<8xf32>
    %5 = vector.multi_reduction <add>, %2, %cst_7 [1] : vector<8x128xf32> to vector<8xf32>
    %6 = vector.shape_cast %5 : vector<8xf32> to vector<8x1xf32>
    %7 = arith.mulf %2, %2 : vector<8x128xf32>
    %cst_8 = arith.constant dense<0.000000e+00> : vector<8xf32>
    %8 = vector.multi_reduction <add>, %7, %cst_8 [1] : vector<8x128xf32> to vector<8xf32>
    %9 = vector.shape_cast %8 : vector<8xf32> to vector<8x1xf32>
    %cst_9 = arith.constant 7.812500e-03 : f32
    %10 = vector.broadcast %cst_9 : f32 to vector<8x1xf32>
    %11 = arith.mulf %6, %10 : vector<8x1xf32>
    %cst_10 = arith.constant 7.812500e-03 : f32
    %12 = vector.broadcast %cst_10 : f32 to vector<8x1xf32>
    %13 = arith.mulf %9, %12 : vector<8x1xf32>
    %14 = arith.mulf %11, %11 : vector<8x1xf32>
    %15 = arith.subf %13, %14 : vector<8x1xf32>
    %cst_11 = arith.constant 0.000000e+00 : f32
    %16 = vector.broadcast %cst_11 : f32 to vector<8x1xf32>
    %17 = arith.maximumf %15, %16 : vector<8x1xf32>
    %cst_12 = arith.constant 9.99999974E-6 : f32
    %18 = vector.broadcast %cst_12 : f32 to vector<8x1xf32>
    %19 = arith.addf %17, %18 : vector<8x1xf32>
    %20 = math.rsqrt %19 : vector<8x1xf32>
    %21 = arith.mulf %3, %20 : vector<8x1xf32>
    %22 = arith.mulf %11, %21 : vector<8x1xf32>
    %23 = arith.subf %4, %22 : vector<8x1xf32>
    %24 = vector.broadcast %21 : vector<8x1xf32> to vector<8x128xf32>
    %25 = arith.mulf %2, %24 : vector<8x128xf32>
    %26 = vector.broadcast %23 : vector<8x1xf32> to vector<8x128xf32>
    %27 = arith.addf %25, %26 : vector<8x128xf32>
    %cst_13 = arith.constant 0.000000e+00 : f32
    %28 = vector.broadcast %cst_13 : f32 to vector<8x128xf32>
    %29 = arith.maximumf %27, %28 : vector<8x128xf32>
    %c0_14 = arith.constant 0 : index
    %c0_15 = arith.constant 0 : index
    %30 = vector.load %arg2[%c0_14, %c0_15] : memref<9x128xf32, #tpu.memory_space<vmem>>, vector<9x128xf32>
    %c9_i32 = arith.constant 9 : i32
    %31 = tpu.dynamic_rotate %29 by %c9_i32 dim 1 : vector<8x128xf32>, i32 -> vector<8x128xf32>
    %32 = vector.extract_strided_slice %30 {offsets = [0, 0], sizes = [1, 128], strides = [1, 1]} : vector<9x128xf32> to vector<1x128xf32>
    %33 = vector.broadcast %32 : vector<1x128xf32> to vector<8x128xf32>
    %34 = arith.mulf %31, %33 : vector<8x128xf32>
    %c8_i32 = arith.constant 8 : i32
    %35 = tpu.dynamic_rotate %29 by %c8_i32 dim 1 : vector<8x128xf32>, i32 -> vector<8x128xf32>
    %36 = vector.extract_strided_slice %30 {offsets = [1, 0], sizes = [1, 128], strides = [1, 1]} : vector<9x128xf32> to vector<1x128xf32>
    %37 = vector.broadcast %36 : vector<1x128xf32> to vector<8x128xf32>
    %38 = arith.mulf %35, %37 : vector<8x128xf32>
    %c7_i32 = arith.constant 7 : i32
    %39 = tpu.dynamic_rotate %29 by %c7_i32 dim 1 : vector<8x128xf32>, i32 -> vector<8x128xf32>
    %40 = vector.extract_strided_slice %30 {offsets = [2, 0], sizes = [1, 128], strides = [1, 1]} : vector<9x128xf32> to vector<1x128xf32>
    %41 = vector.broadcast %40 : vector<1x128xf32> to vector<8x128xf32>
    %42 = arith.mulf %39, %41 : vector<8x128xf32>
    %c1_i32 = arith.constant 1 : i32
    %43 = tpu.dynamic_rotate %29 by %c1_i32 dim 1 : vector<8x128xf32>, i32 -> vector<8x128xf32>
    %44 = vector.extract_strided_slice %30 {offsets = [3, 0], sizes = [1, 128], strides = [1, 1]} : vector<9x128xf32> to vector<1x128xf32>
    %45 = vector.broadcast %44 : vector<1x128xf32> to vector<8x128xf32>
    %46 = arith.mulf %43, %45 : vector<8x128xf32>
    %c127_i32 = arith.constant 127 : i32
    %47 = tpu.dynamic_rotate %29 by %c127_i32 dim 1 : vector<8x128xf32>, i32 -> vector<8x128xf32>
    %48 = vector.extract_strided_slice %30 {offsets = [5, 0], sizes = [1, 128], strides = [1, 1]} : vector<9x128xf32> to vector<1x128xf32>
    %49 = vector.broadcast %48 : vector<1x128xf32> to vector<8x128xf32>
    %50 = arith.mulf %47, %49 : vector<8x128xf32>
    %c121_i32 = arith.constant 121 : i32
    %51 = tpu.dynamic_rotate %29 by %c121_i32 dim 1 : vector<8x128xf32>, i32 -> vector<8x128xf32>
    %52 = vector.extract_strided_slice %30 {offsets = [6, 0], sizes = [1, 128], strides = [1, 1]} : vector<9x128xf32> to vector<1x128xf32>
    %53 = vector.broadcast %52 : vector<1x128xf32> to vector<8x128xf32>
    %54 = arith.mulf %51, %53 : vector<8x128xf32>
    %c120_i32 = arith.constant 120 : i32
    %55 = tpu.dynamic_rotate %29 by %c120_i32 dim 1 : vector<8x128xf32>, i32 -> vector<8x128xf32>
    %56 = vector.extract_strided_slice %30 {offsets = [7, 0], sizes = [1, 128], strides = [1, 1]} : vector<9x128xf32> to vector<1x128xf32>
    %57 = vector.broadcast %56 : vector<1x128xf32> to vector<8x128xf32>
    %58 = arith.mulf %55, %57 : vector<8x128xf32>
    %c119_i32 = arith.constant 119 : i32
    %59 = tpu.dynamic_rotate %29 by %c119_i32 dim 1 : vector<8x128xf32>, i32 -> vector<8x128xf32>
    %60 = vector.extract_strided_slice %30 {offsets = [8, 0], sizes = [1, 128], strides = [1, 1]} : vector<9x128xf32> to vector<1x128xf32>
    %61 = vector.broadcast %60 : vector<1x128xf32> to vector<8x128xf32>
    %62 = arith.mulf %59, %61 : vector<8x128xf32>
    %63 = tpu.concatenate %34, %38, %42, %46, %29, %50, %54, %58, %62 in 0 : vector<8x128xf32>, vector<8x128xf32>, vector<8x128xf32>, vector<8x128xf32>, vector<8x128xf32>, vector<8x128xf32>, vector<8x128xf32>, vector<8x128xf32>, vector<8x128xf32> -> vector<72x128xf32>
    %64 = arith.truncf %63 : vector<72x128xf32> to vector<72x128xbf16>
    %c0_16 = arith.constant 0 : index
    %c0_17 = arith.constant 0 : index
    %65 = vector.load %arg6[%c0_16, %c0_17] : memref<8x72xbf16, #tpu.memory_space<vmem>>, vector<8x72xbf16>
    %cst_18 = arith.constant dense<0.000000e+00> : vector<8x128xf32>
    %66 = tpu.matmul %65, %64, %cst_18 {dimension_numbers = #tpu.dot_dimension_numbers<[1], [0], [0], [1], [0, 0, 1, 1], [], []>} : vector<8x72xbf16>, vector<72x128xbf16>, vector<8x128xf32> -> vector<8x128xf32>
    %c0_19 = arith.constant 0 : index
    %c0_20 = arith.constant 0 : index
    %67 = vector.load %arg7[%c0_19, %c0_20] : memref<8x1xf32, #tpu.memory_space<vmem>>, vector<8x1xf32>
    %c0_21 = arith.constant 0 : index
    %c0_22 = arith.constant 0 : index
    %68 = vector.load %arg8[%c0_21, %c0_22] : memref<8x1xf32, #tpu.memory_space<vmem>>, vector<8x1xf32>
    %cst_23 = arith.constant dense<0.000000e+00> : vector<8xf32>
    %69 = vector.multi_reduction <add>, %66, %cst_23 [1] : vector<8x128xf32> to vector<8xf32>
    %70 = vector.shape_cast %69 : vector<8xf32> to vector<8x1xf32>
    %71 = arith.mulf %66, %66 : vector<8x128xf32>
    %cst_24 = arith.constant dense<0.000000e+00> : vector<8xf32>
    %72 = vector.multi_reduction <add>, %71, %cst_24 [1] : vector<8x128xf32> to vector<8xf32>
    %73 = vector.shape_cast %72 : vector<8xf32> to vector<8x1xf32>
    %cst_25 = arith.constant 7.812500e-03 : f32
    %74 = vector.broadcast %cst_25 : f32 to vector<8x1xf32>
    %75 = arith.mulf %70, %74 : vector<8x1xf32>
    %cst_26 = arith.constant 7.812500e-03 : f32
    %76 = vector.broadcast %cst_26 : f32 to vector<8x1xf32>
    %77 = arith.mulf %73, %76 : vector<8x1xf32>
    %78 = arith.mulf %75, %75 : vector<8x1xf32>
    %79 = arith.subf %77, %78 : vector<8x1xf32>
    %cst_27 = arith.constant 0.000000e+00 : f32
    %80 = vector.broadcast %cst_27 : f32 to vector<8x1xf32>
    %81 = arith.maximumf %79, %80 : vector<8x1xf32>
    %cst_28 = arith.constant 9.99999974E-6 : f32
    %82 = vector.broadcast %cst_28 : f32 to vector<8x1xf32>
    %83 = arith.addf %81, %82 : vector<8x1xf32>
    %84 = math.rsqrt %83 : vector<8x1xf32>
    %85 = arith.mulf %67, %84 : vector<8x1xf32>
    %86 = arith.mulf %75, %85 : vector<8x1xf32>
    %87 = arith.subf %68, %86 : vector<8x1xf32>
    %88 = vector.broadcast %85 : vector<8x1xf32> to vector<8x128xf32>
    %89 = arith.mulf %66, %88 : vector<8x128xf32>
    %90 = vector.broadcast %87 : vector<8x1xf32> to vector<8x128xf32>
    %91 = arith.addf %89, %90 : vector<8x128xf32>
    %c0_29 = arith.constant 0 : index
    %c0_30 = arith.constant 0 : index
    %92 = vector.load %arg9[%c0_29, %c0_30] : memref<8x4xbf16, #tpu.memory_space<vmem>>, vector<8x4xbf16>
    %c0_31 = arith.constant 0 : index
    %c0_32 = arith.constant 0 : index
    %93 = vector.load %arg1[%c0_31, %c0_32] : memref<4x128xbf16, #tpu.memory_space<vmem>>, vector<4x128xbf16>
    %cst_33 = arith.constant dense<0.000000e+00> : vector<8x128xf32>
    %94 = tpu.matmul %92, %93, %cst_33 {dimension_numbers = #tpu.dot_dimension_numbers<[1], [0], [0], [1], [0, 0, 1, 1], [], []>} : vector<8x4xbf16>, vector<4x128xbf16>, vector<8x128xf32> -> vector<8x128xf32>
    %c0_34 = arith.constant 0 : index
    %c0_35 = arith.constant 0 : index
    %95 = vector.load %arg10[%c0_34, %c0_35] : memref<8x1xf32, #tpu.memory_space<vmem>>, vector<8x1xf32>
    %c0_36 = arith.constant 0 : index
    %c0_37 = arith.constant 0 : index
    %96 = vector.load %arg11[%c0_36, %c0_37] : memref<8x1xf32, #tpu.memory_space<vmem>>, vector<8x1xf32>
    %cst_38 = arith.constant dense<0.000000e+00> : vector<8xf32>
    %97 = vector.multi_reduction <add>, %94, %cst_38 [1] : vector<8x128xf32> to vector<8xf32>
    %98 = vector.shape_cast %97 : vector<8xf32> to vector<8x1xf32>
    %99 = arith.mulf %94, %94 : vector<8x128xf32>
    %cst_39 = arith.constant dense<0.000000e+00> : vector<8xf32>
    %100 = vector.multi_reduction <add>, %99, %cst_39 [1] : vector<8x128xf32> to vector<8xf32>
    %101 = vector.shape_cast %100 : vector<8xf32> to vector<8x1xf32>
    %cst_40 = arith.constant 7.812500e-03 : f32
    %102 = vector.broadcast %cst_40 : f32 to vector<8x1xf32>
    %103 = arith.mulf %98, %102 : vector<8x1xf32>
    %cst_41 = arith.constant 7.812500e-03 : f32
    %104 = vector.broadcast %cst_41 : f32 to vector<8x1xf32>
    %105 = arith.mulf %101, %104 : vector<8x1xf32>
    %106 = arith.mulf %103, %103 : vector<8x1xf32>
    %107 = arith.subf %105, %106 : vector<8x1xf32>
    %cst_42 = arith.constant 0.000000e+00 : f32
    %108 = vector.broadcast %cst_42 : f32 to vector<8x1xf32>
    %109 = arith.maximumf %107, %108 : vector<8x1xf32>
    %cst_43 = arith.constant 9.99999974E-6 : f32
    %110 = vector.broadcast %cst_43 : f32 to vector<8x1xf32>
    %111 = arith.addf %109, %110 : vector<8x1xf32>
    %112 = math.rsqrt %111 : vector<8x1xf32>
    %113 = arith.mulf %95, %112 : vector<8x1xf32>
    %114 = arith.mulf %103, %113 : vector<8x1xf32>
    %115 = arith.subf %96, %114 : vector<8x1xf32>
    %116 = vector.broadcast %113 : vector<8x1xf32> to vector<8x128xf32>
    %117 = arith.mulf %94, %116 : vector<8x128xf32>
    %118 = vector.broadcast %115 : vector<8x1xf32> to vector<8x128xf32>
    %119 = arith.addf %117, %118 : vector<8x128xf32>
    %120 = arith.addf %91, %119 : vector<8x128xf32>
    %cst_44 = arith.constant 0.000000e+00 : f32
    %121 = vector.broadcast %cst_44 : f32 to vector<8x128xf32>
    %122 = arith.maximumf %120, %121 : vector<8x128xf32>
    %c0_45 = arith.constant 0 : index
    %c0_46 = arith.constant 0 : index
    %123 = vector.load %arg12[%c0_45, %c0_46] : memref<8x128xf32, #tpu.memory_space<vmem>>, vector<8x128xf32>
    tpu.vector_store %arg12[%c0_45, %c0_46], %122 {strides = array<i32>} : memref<8x128xf32, #tpu.memory_space<vmem>>, vector<8x128xf32>,
    return
  }
}

</mosaic_0001>

<llo_original>
// kernel: tpu_custom_call.1
$region0: #{tpu_custom_call.1}
  #allocation0 [shape = 'u32[]', space=smem, size = 0x4, offset = 0x4, fixed_abs, tag = 'smem constant byte address 0x4 - core index']
  #allocation1 [shape = 'u32[144,128]{1,0:T(1,128)}', space=vmem, size = 0x12000, scoped, tag = 'internal scratch']
  %s0 = inlined_call_operand.vmem [shape: bf16[36,128], index: 0, kind: input, shape index: {}]
  %s1 = inlined_call_operand.vmem [shape: bf16[4,128], index: 1, kind: input, shape index: {}]
  %s2 = inlined_call_operand.vmem [shape: f32[9,128], index: 2, kind: input, shape index: {}]
  %s3 = inlined_call_operand.vmem [shape: bf16[8,36], index: 3, kind: input, shape index: {}]
  %s4 = inlined_call_operand.vmem [shape: f32[8,1], index: 4, kind: input, shape index: {}]
  %s5 = inlined_call_operand.vmem [shape: f32[8,1], index: 5, kind: input, shape index: {}]
  %s6 = inlined_call_operand.vmem [shape: bf16[8,72], index: 6, kind: input, shape index: {}]
  %s7 = inlined_call_operand.vmem [shape: f32[8,1], index: 7, kind: input, shape index: {}]
  %s8 = inlined_call_operand.vmem [shape: f32[8,1], index: 8, kind: input, shape index: {}]
  %s9 = inlined_call_operand.vmem [shape: bf16[8,4], index: 9, kind: input, shape index: {}]
  %s10 = inlined_call_operand.vmem [shape: f32[8,1], index: 10, kind: input, shape index: {}]
  %s11 = inlined_call_operand.vmem [shape: f32[8,1], index: 11, kind: input, shape index: {}]
  %s12 = inlined_call_operand.hbm [shape: f32[8,128], index: 12, kind: output, shape index: {}]
  %s13 = sld [smem:[#allocation0]]
  $region58: #{tpu_custom_call.1} parent=0
    _
  %s15 = ssub.s32 1, %s13
  %s16 = scalar_select 0, %s15, %s13
  $region1: #{tpu_custom_call.1} parent=0
    #allocation2 [shape = 'u8[4096]{0}', space=vmem, size = 0x1000, scoped, tag = 'output window, operand 0, single buffered']
    #allocation3 [shape = 's32[1]{0}', space=sflag, size = 0x4, scoped, tag = 'scoped memory for tpu_custom_call.1']
    %17 = vsyncpa [#allocation3], 0
    // Predicated region
    $region2: #{tpu_custom_call.1} parent=1 // pred_check
      _
    $region3: #{tpu_custom_call.1} parent=1 // pred_check_branch
      %19 = sbr.rel (0) target = $region5
    $region4: #{tpu_custom_call.1} parent=1 // pred_region
      _
    $region5: #{tpu_custom_call.1} parent=1 // pred_fallthru
      _
    // Predicated region
    $region6: #{tpu_custom_call.1} parent=1 // pred_check
      _
    $region7: #{tpu_custom_call.1} parent=1 // pred_check_branch
      %21 = sbr.rel (0) target = $region9
    $region8: #{tpu_custom_call.1} parent=1 // pred_region
      _
    $region9: #{tpu_custom_call.1} parent=1 // pred_fallthru
      _
    // Predicated region
    $region10: #{tpu_custom_call.1} parent=1 // pred_check
      _
    $region11: #{tpu_custom_call.1} parent=1 // pred_check_branch
      %23 = sbr.rel (0) target = $region13
    $region12: #{tpu_custom_call.1} parent=1 // pred_region
      _
    $region13: #{tpu_custom_call.1} parent=1 // pred_fallthru
      _
    // Predicated region
    $region14: #{tpu_custom_call.1} parent=1 // pred_check
      _
    $region15: #{tpu_custom_call.1} parent=1 // pred_check_branch
      %25 = sbr.rel (0) target = $region17
    $region16: #{tpu_custom_call.1} parent=1 // pred_region
      _
    $region17: #{tpu_custom_call.1} parent=1 // pred_fallthru
      _
    // Predicated region
    $region18: #{tpu_custom_call.1} parent=1 // pred_check
      _
    $region19: #{tpu_custom_call.1} parent=1 // pred_check_branch
      %27 = sbr.rel (0) target = $region21
    $region20: #{tpu_custom_call.1} parent=1 // pred_region
      _
    $region21: #{tpu_custom_call.1} parent=1 // pred_fallthru
      _
    // Predicated region
    $region22: #{tpu_custom_call.1} parent=1 // pred_check
      _
    $region23: #{tpu_custom_call.1} parent=1 // pred_check_branch
      %29 = sbr.rel (0) target = $region25
    $region24: #{tpu_custom_call.1} parent=1 // pred_region
      _
    $region25: #{tpu_custom_call.1} parent=1 // pred_fallthru
      _
    // Predicated region
    $region26: #{tpu_custom_call.1} parent=1 // pred_check
      _
    $region27: #{tpu_custom_call.1} parent=1 // pred_check_branch
      %31 = sbr.rel (0) target = $region29
    $region28: #{tpu_custom_call.1} parent=1 // pred_region
      _
    $region29: #{tpu_custom_call.1} parent=1 // pred_fallthru
      _
    // Predicated region
    $region30: #{tpu_custom_call.1} parent=1 // pred_check
      _
    $region31: #{tpu_custom_call.1} parent=1 // pred_check_branch
      %33 = sbr.rel (0) target = $region33
    $region32: #{tpu_custom_call.1} parent=1 // pred_region
      _
    $region33: #{tpu_custom_call.1} parent=1 // pred_fallthru
      _
    // Predicated region
    $region34: #{tpu_custom_call.1} parent=1 // pred_check
      _
    $region35: #{tpu_custom_call.1} parent=1 // pred_check_branch
      %35 = sbr.rel (0) target = $region37
    $region36: #{tpu_custom_call.1} parent=1 // pred_region
      _
    $region37: #{tpu_custom_call.1} parent=1 // pred_fallthru
      _
    // Predicated region
    $region38: #{tpu_custom_call.1} parent=1 // pred_check
      _
    $region39: #{tpu_custom_call.1} parent=1 // pred_check_branch
      %37 = sbr.rel (0) target = $region41
    $region40: #{tpu_custom_call.1} parent=1 // pred_region
      _
    $region41: #{tpu_custom_call.1} parent=1 // pred_fallthru
      _
    // Predicated region
    $region42: #{tpu_custom_call.1} parent=1 // pred_check
      _
    $region43: #{tpu_custom_call.1} parent=1 // pred_check_branch
      %39 = sbr.rel (0) target = $region45
    $region44: #{tpu_custom_call.1} parent=1 // pred_region
      _
    $region45: #{tpu_custom_call.1} parent=1 // pred_fallthru
      _
    // Predicated region
    $region46: #{tpu_custom_call.1} parent=1 // pred_check
      _
    $region47: #{tpu_custom_call.1} parent=1 // pred_check_branch
      %41 = sbr.rel (0) target = $region49
    $region48: #{tpu_custom_call.1} parent=1 // pred_region
      _
    $region49: #{tpu_custom_call.1} parent=1 // pred_fallthru
      _
    %v43 = vld [vmem:[%s3] sm:$0xf]
    %v44 = vld [vmem:[%s0] sm:$0xf]
    %v45 = vld [vmem:[%s0 + $0x4] sm:$0xf]
    %v46 = vld [vmem:[%s0 + $0x8] sm:$0xf]
    %v47 = vld [vmem:[%s0 + $0xc] sm:$0xf]
    %v48 = vld [vmem:[%s0 + $0x10] sm:$0x3]
    %v54 = vunpack.c.l.b16 %v44
    %v55 = vunpack.c.l.b16 %v45
    %v56 = vunpack.c.l.b16 %v46
    %v57 = vunpack.c.l.b16 %v47
    %v58 = vunpack.c.l.b16 %v48
    %v59 = vpack.c.b16 %v55, %v54
    %v60 = vpack.c.b16 %v57, %v56
    %v61 = vpack.c.b16 %v58, %v58
    %vm64 = vcmask 293888
    %v66 = vsel %vm64, %v43, 0
    %vm68 = vcmask 1041408
    %v70 = vsel %vm68, %v61, 0
    %72 = vmatprep.subr.bf16.mxu0 0
    %73 = vmatpush1.bf16.msra.mxu0 %v59
    %74 = vmatprep.subr.bf16.mxu0 0
    %75 = vmatpush1.bf16.msra.mxu0 %v60
    %76 = vmatprep.subr.bf16.mxu0 0
    %77 = vmatpush1.bf16.msra.mxu0 %v70
    %78 = vmatprep.subr.bf16.mxu0 0
    %79 = vmatpush1.bf16.msra.mxu0 0
    %80 = vmatprep.subr.bf16.mxu0 0
    %81 = vmatpush1.bf16.msra.mxu0 0
    %82 = vmatprep.subr.bf16.mxu0 0
    %83 = vmatpush1.bf16.msra.mxu0 0
    %84 = vmatprep.subr.bf16.mxu0 0
    %85 = vmatpush1.bf16.msra.mxu0 0
    %86 = vmatprep.subr.bf16.mxu0 0
    %87 = vmatpush1.bf16.msra.mxu0 0
    %88 = vmatprep.subr.bf16.mxu0 0
    %89 = vmatpush1.bf16.msra.mxu0 0
    %90 = vmatprep.subr.bf16.mxu0 0
    %91 = vmatpush1.bf16.msra.mxu0 0
    %92 = vmatprep.subr.bf16.mxu0 0
    %93 = vmatpush1.bf16.msra.mxu0 0
    %94 = vmatprep.subr.bf16.mxu0 0
    %95 = vmatpush1.bf16.msra.mxu0 0
    %96 = vmatprep.subr.bf16.mxu0 0
    %97 = vmatpush1.bf16.msra.mxu0 0
    %98 = vmatprep.subr.bf16.mxu0 0
    %99 = vmatpush1.bf16.msra.mxu0 0
    %100 = vmatprep.subr.bf16.mxu0 0
    %101 = vmatpush1.bf16.msra.mxu0 0
    %102 = vmatprep.subr.bf16.mxu0 0
    %103 = vmatpush1.bf16.msra.mxu0 0
    %104 = vmatprep.mubr.bf16.mxu0 0
    %105 = vmatmul.mubr.bf16.gmra.mrb[0].mxu0 %v66
    %v106 = vpop.f32.mrb[0].mxu0
    %v107 = vadd.f32 0.0, %v106
    %v108 = vpop.f32.mrb[0].mxu0
    %v109 = vpop.f32.mrb[0].mxu0
    %v110 = vpop.f32.mrb[0].mxu0
    %111 = vdwg.mxu0
    %v112 = vld [vmem:[%s4] sm:$0xff]
    %v113 = vld [vmem:[%s5] sm:$0xff]
    %114 = vadd.xlane.f32.xlu0 %v107
    %v115 = vpop.xlane.xlu0 %114
    %v116 = vmul.f32 %v107, %v107
    %117 = vadd.xlane.f32.xlu0 %v116
    %v118 = vpop.xlane.xlu0 %117
    %v119 = vmul.f32 %v115, 0.0078125
    %v120 = vmul.f32 %v118, 0.0078125
    %v121 = vmul.f32 %v119, %v119
    %v122 = vsub.f32 %v120, %v121
    %v123 = vmax.f32 %v122, 0.0
    %v124 = vadd.f32 %v123, 1e-05
    %v125 = vrsqrt.pop %v124
    %v126 = vmul.f32 %v112, %v125
    %v127 = vmul.f32 %v119, %v126
    %v128 = vsub.f32 %v113, %v127
    %130 = vset.pattern.permute.xlu0 0
    %131 = vperm.xlu0 %130, %v126
    %v132 = vpop.permute.xlu0 %131
    %v134 = vmul.f32 %v107, %v132
    %136 = vset.pattern.permute.xlu0 0
    %137 = vperm.xlu0 %136, %v128
    %v138 = vpop.permute.xlu0 %137
    %v140 = vadd.f32 %v134, %v138
    %v141 = vmax.f32 %v140, 0.0
    %v142 = vld [vmem:[%s2] sm:$0xff]
    %v143 = vld [vmem:[%s2 + $0x8] sm:$0x1]
    %144 = vrot.lane.b32.xlu0 %v141, 9
    %v145 = vpop.permute.xlu0 %144
    %v146 = vlaneseq
    %v147 = vshrl.u32 %v146, 7
    %v148 = vsub.s32 0, %v147
    %v149 = vrot.slane %v142, %v148
    %v150 = vmul.f32 %v145, %v149
    %151 = vrot.lane.b32.xlu0 %v141, 8
    %v152 = vpop.permute.xlu0 %151
    %v153 = vlaneseq
    %v154 = vshrl.u32 %v153, 7
    %v155 = vsub.s32 1, %v154
    %v156 = vrot.slane %v142, %v155
    %v157 = vmul.f32 %v152, %v156
    %158 = vrot.lane.b32.xlu0 %v141, 7
    %v159 = vpop.permute.xlu0 %158
    %v160 = vlaneseq
    %v161 = vshrl.u32 %v160, 7
    %v162 = vsub.s32 2, %v161
    %v163 = vrot.slane %v142, %v162
    %v164 = vmul.f32 %v159, %v163
    %165 = vrot.lane.b32.xlu0 %v141, 1
    %v166 = vpop.permute.xlu0 %165
    %v167 = vlaneseq
    %v168 = vshrl.u32 %v167, 7
    %v169 = vsub.s32 3, %v168
    %v170 = vrot.slane %v142, %v169
    %v171 = vmul.f32 %v166, %v170
    %172 = vrot.lane.b32.xlu0 %v141, 127
    %v173 = vpop.permute.xlu0 %172
    %v174 = vlaneseq
    %v175 = vshrl.u32 %v174, 7
    %v176 = vsub.s32 5, %v175
    %v177 = vrot.slane %v142, %v176
    %v178 = vmul.f32 %v173, %v177
    %179 = vrot.lane.b32.xlu0 %v141, 121
    %v180 = vpop.permute.xlu0 %179
    %v181 = vlaneseq
    %v182 = vshrl.u32 %v181, 7
    %v183 = vsub.s32 6, %v182
    %v184 = vrot.slane %v142, %v183
    %v185 = vmul.f32 %v180, %v184
    %186 = vrot.lane.b32.xlu0 %v141, 120
    %v187 = vpop.permute.xlu0 %186
    %v188 = vlaneseq
    %v189 = vshrl.u32 %v188, 7
    %v190 = vsub.s32 7, %v189
    %v191 = vrot.slane %v142, %v190
    %v192 = vmul.f32 %v187, %v191
    %193 = vrot.lane.b32.xlu0 %v141, 119
    %v194 = vpop.permute.xlu0 %193
    %v195 = vlaneseq
    %v196 = vshrl.u32 %v195, 7
    %v197 = vsub.s32 0, %v196
    %v198 = vrot.slane %v143, %v197
    %v199 = vmul.f32 %v194, %v198
    %v200 = vpack.c.bf16 %v157, %v150
    %v201 = vpack.c.bf16 %v171, %v164
    %v202 = vpack.c.bf16 %v178, %v141
    %v203 = vpack.c.bf16 %v192, %v185
    %v204 = vpack.c.bf16 %v199, %v199
    %v205 = vld [vmem:[%s6] sm:$0xf]
    %vm206 = vcmask 588800
    %v208 = vsel %vm206, %v205, 0
    %vm210 = vcmask 1043456
    %v212 = vsel %vm210, %v204, 0
    %214 = vmatprep.subr.bf16.mxu0 0
    %215 = vmatpush1.bf16.msra.mxu0 %v200
    %216 = vmatprep.subr.bf16.mxu0 0
    %217 = vmatpush1.bf16.msra.mxu0 %v201
    %218 = vmatprep.subr.bf16.mxu0 0
    %219 = vmatpush1.bf16.msra.mxu0 %v202
    %220 = vmatprep.subr.bf16.mxu0 0
    %221 = vmatpush1.bf16.msra.mxu0 %v203
    %222 = vmatprep.subr.bf16.mxu0 0
    %223 = vmatpush1.bf16.msra.mxu0 %v212
    %224 = vmatprep.subr.bf16.mxu0 0
    %225 = vmatpush1.bf16.msra.mxu0 0
    %226 = vmatprep.subr.bf16.mxu0 0
    %227 = vmatpush1.bf16.msra.mxu0 0
    %228 = vmatprep.subr.bf16.mxu0 0
    %229 = vmatpush1.bf16.msra.mxu0 0
    %230 = vmatprep.subr.bf16.mxu0 0
    %231 = vmatpush1.bf16.msra.mxu0 0
    %232 = vmatprep.subr.bf16.mxu0 0
    %233 = vmatpush1.bf16.msra.mxu0 0
    %234 = vmatprep.subr.bf16.mxu0 0
    %235 = vmatpush1.bf16.msra.mxu0 0
    %236 = vmatprep.subr.bf16.mxu0 0
    %237 = vmatpush1.bf16.msra.mxu0 0
    %238 = vmatprep.subr.bf16.mxu0 0
    %239 = vmatpush1.bf16.msra.mxu0 0
    %240 = vmatprep.subr.bf16.mxu0 0
    %241 = vmatpush1.bf16.msra.mxu0 0
    %242 = vmatprep.subr.bf16.mxu0 0
    %243 = vmatpush1.bf16.msra.mxu0 0
    %244 = vmatprep.subr.bf16.mxu0 0
    %245 = vmatpush1.bf16.msra.mxu0 0
    %246 = vmatprep.mubr.bf16.mxu0 0
    %247 = vmatmul.mubr.bf16.gmra.mrb[0].mxu0 %v208
    %v248 = vpop.f32.mrb[0].mxu0
    %v249 = vadd.f32 0.0, %v248
    %v250 = vpop.f32.mrb[0].mxu0
    %v251 = vpop.f32.mrb[0].mxu0
    %v252 = vpop.f32.mrb[0].mxu0
    %253 = vdwg.mxu0
    %v254 = vld [vmem:[%s7] sm:$0xff]
    %v255 = vld [vmem:[%s8] sm:$0xff]
    %256 = vadd.xlane.f32.xlu0 %v249
    %v257 = vpop.xlane.xlu0 %256
    %v258 = vmul.f32 %v249, %v249
    %259 = vadd.xlane.f32.xlu0 %v258
    %v260 = vpop.xlane.xlu0 %259
    %v261 = vmul.f32 %v257, 0.0078125
    %v262 = vmul.f32 %v260, 0.0078125
    %v263 = vmul.f32 %v261, %v261
    %v264 = vsub.f32 %v262, %v263
    %v265 = vmax.f32 %v264, 0.0
    %v266 = vadd.f32 %v265, 1e-05
    %v267 = vrsqrt.pop %v266
    %v268 = vmul.f32 %v254, %v267
    %v269 = vmul.f32 %v261, %v268
    %v270 = vsub.f32 %v255, %v269
    %272 = vset.pattern.permute.xlu0 0
    %273 = vperm.xlu0 %272, %v268
    %v274 = vpop.permute.xlu0 %273
    %v276 = vmul.f32 %v249, %v274
    %278 = vset.pattern.permute.xlu0 0
    %279 = vperm.xlu0 %278, %v270
    %v280 = vpop.permute.xlu0 %279
    %v282 = vadd.f32 %v276, %v280
    %v283 = vld [vmem:[%s9] sm:$0xf]
    %v284 = vld [vmem:[%s1] sm:$0x3]
    %vm285 = vcmask 31744
    %v287 = vsel %vm285, %v283, 0
    %v290 = vsel %vm68, %v284, 0
    %292 = vmatprep.subr.bf16.mxu0 0
    %293 = vmatpush1.bf16.msra.mxu0 %v290
    %294 = vmatprep.subr.bf16.mxu0 0
    %295 = vmatpush1.bf16.msra.mxu0 0
    %296 = vmatprep.subr.bf16.mxu0 0
    %297 = vmatpush1.bf16.msra.mxu0 0
    %298 = vmatprep.subr.bf16.mxu0 0
    %299 = vmatpush1.bf16.msra.mxu0 0
    %300 = vmatprep.subr.bf16.mxu0 0
    %301 = vmatpush1.bf16.msra.mxu0 0
    %302 = vmatprep.subr.bf16.mxu0 0
    %303 = vmatpush1.bf16.msra.mxu0 0
    %304 = vmatprep.subr.bf16.mxu0 0
    %305 = vmatpush1.bf16.msra.mxu0 0
    %306 = vmatprep.subr.bf16.mxu0 0
    %307 = vmatpush1.bf16.msra.mxu0 0
    %308 = vmatprep.subr.bf16.mxu0 0
    %309 = vmatpush1.bf16.msra.mxu0 0
    %310 = vmatprep.subr.bf16.mxu0 0
    %311 = vmatpush1.bf16.msra.mxu0 0
    %312 = vmatprep.subr.bf16.mxu0 0
    %313 = vmatpush1.bf16.msra.mxu0 0
    %314 = vmatprep.subr.bf16.mxu0 0
    %315 = vmatpush1.bf16.msra.mxu0 0
    %316 = vmatprep.subr.bf16.mxu0 0
    %317 = vmatpush1.bf16.msra.mxu0 0
    %318 = vmatprep.subr.bf16.mxu0 0
    %319 = vmatpush1.bf16.msra.mxu0 0
    %320 = vmatprep.subr.bf16.mxu0 0
    %321 = vmatpush1.bf16.msra.mxu0 0
    %322 = vmatprep.subr.bf16.mxu0 0
    %323 = vmatpush1.bf16.msra.mxu0 0
    %324 = vmatprep.mubr.bf16.mxu0 0
    %325 = vmatmul.mubr.bf16.gmra.mrb[0].mxu0 %v287
    %v326 = vpop.f32.mrb[0].mxu0
    %v327 = vadd.f32 0.0, %v326
    %v328 = vpop.f32.mrb[0].mxu0
    %v329 = vpop.f32.mrb[0].mxu0
    %v330 = vpop.f32.mrb[0].mxu0
    %331 = vdwg.mxu0
    %v332 = vld [vmem:[%s10] sm:$0xff]
    %v333 = vld [vmem:[%s11] sm:$0xff]
    %334 = vadd.xlane.f32.xlu0 %v327
    %v335 = vpop.xlane.xlu0 %334
    %v336 = vmul.f32 %v327, %v327
    %337 = vadd.xlane.f32.xlu0 %v336
    %v338 = vpop.xlane.xlu0 %337
    %v339 = vmul.f32 %v335, 0.0078125
    %v340 = vmul.f32 %v338, 0.0078125
    %v341 = vmul.f32 %v339, %v339
    %v342 = vsub.f32 %v340, %v341
    %v343 = vmax.f32 %v342, 0.0
    %v344 = vadd.f32 %v343, 1e-05
    %v345 = vrsqrt.pop %v344
    %v346 = vmul.f32 %v332, %v345
    %v347 = vmul.f32 %v339, %v346
    %v348 = vsub.f32 %v333, %v347
    %350 = vset.pattern.permute.xlu0 0
    %351 = vperm.xlu0 %350, %v346
    %v352 = vpop.permute.xlu0 %351
    %v354 = vmul.f32 %v327, %v352
    %356 = vset.pattern.permute.xlu0 0
    %357 = vperm.xlu0 %356, %v348
    %v358 = vpop.permute.xlu0 %357
    %v360 = vadd.f32 %v354, %v358
    %v361 = vadd.f32 %v282, %v360
    %v362 = vmax.f32 %v361, 0.0
    %363 = vst [vmem:[#allocation2] sm:$0xff] %v362
    // Predicated region
    $region50: #{tpu_custom_call.1} parent=1 // pred_check
      _
    $region51: #{tpu_custom_call.1} parent=1 // pred_check_branch
      %365 = sbr.rel (0) target = $region53
    $region52: #{tpu_custom_call.1} parent=1 // pred_region
      %s367 = ssub.s32 128, 128
      %368 = vsyncadd [#allocation3], %s367
      %s370 = sshll.u32 [#allocation2], 4
      %s371 = int_to_ptr.vmem [resolvable:$true] %s370
      %373 = dma.vmem_to_hbm [thread:$0]  %s371, 128, %s12, [#allocation3]
    $region53: #{tpu_custom_call.1} parent=1 // pred_fallthru
      _
    // Predicated region
    $region54: #{tpu_custom_call.1} parent=1 // pred_check
      _
    $region55: #{tpu_custom_call.1} parent=1 // pred_check_branch
      %375 = sbr.rel (0) target = $region57
    $region56: #{tpu_custom_call.1} parent=1 // pred_region
      %376 = dma.done [#allocation3], 128
    $region57: #{tpu_custom_call.1} parent=1 // pred_fallthru
      _
    %377 = vsyncpa [#allocation3], 1

</llo_original>
